<compile_context>
chip_gen: v7x
topology: tpu7x:2x2x1
jax: 0.10.0
libtpu: 0.0.40
codegen_flags: <defaults>
</compile_context>

<pallas_src>
import functools

import numpy as np
import jax
import jax.numpy as jnp
from jax.experimental import pallas as pl
from jax.experimental.pallas import tpu as pltpu


# ----------------------------------------------------------------------------
# Host-side helpers (cached: feedback item about not rebuilding pool operators)
# ----------------------------------------------------------------------------
def _adaptive_pool_matrix(in_size, out_size):
    """Row-stochastic matrix reproducing torch AdaptiveAvgPool semantics."""
    P = np.zeros((out_size, in_size), dtype=np.float32)
    for i in range(out_size):
        start = (i * in_size) // out_size
        end = -((-(i + 1) * in_size) // out_size)          # ceil((i+1)*in/out)
        P[i, start:end] = 1.0 / float(end - start)
    return P


def _adaptive_pool_bins(in_size, out_size):
    """(start, end) index ranges of torch adaptive average pooling."""
    bins = []
    for i in range(out_size):
        start = (i * in_size) // out_size
        end = -((-(i + 1) * in_size) // out_size)
        bins.append((start, end))
    return tuple(bins)


@functools.lru_cache(maxsize=None)
def _hw_pool_matrix_ext(h, w):
    """(H*W, 10): cols 0..8 = adaptive pool to 3x3 (h-major), col 9 = 1/(H*W)."""
    ph = _adaptive_pool_matrix(h, 3)                       # (3, H)
    pw = _adaptive_pool_matrix(w, 3)                       # (3, W)
    phw = np.kron(ph, pw)                                  # (9, H*W), row = h3*3+w3
    mat = np.zeros((h * w, 10), dtype=np.float32)
    mat[:, :9] = phw.T
    mat[:, 9] = 1.0 / float(h * w)                         # folds gap1 into the matmul
    return mat


# ----------------------------------------------------------------------------
# Kernel
# ----------------------------------------------------------------------------
def _route_kernel(x_ref, phw_ref, w1a_ref, w1b_ref, wd_ref, w3t_ref, o_ref,
                  *, bt, c, s, d_bins):
    # x_ref  : (Bt*C, D, HW) bf16  -- Bt batch elements, rows (batch, channel)
    # phw_ref: (HW, 10)  f32       -- cols 0..8: pool-to-3x3, col 9: global mean
    # w1a_ref: (S, C)    f32       -- 1x1x1 conv weights acting on the gap1 half
    # w1b_ref: (S, C)    f32       -- 1x1x1 conv weights acting on the gap3 half
    # wd_ref : (S, 27)   f32       -- depthwise 3x3x3 kernel, (d,h,w) row-major
    # w3t_ref: (S, EO)   f32       -- final 1x1x1 conv, transposed
    # o_ref  : (1, Bt, EO) f32
    f32 = jnp.float32
    btc = bt * c

    x = x_ref[...].astype(f32)                                        # (BtC, D, HW)

    # --- adaptive pooling, D axis (sublane reductions in f32) ---------------
    groups = [jnp.mean(x[:, lo:hi, :], axis=1) for (lo, hi) in d_bins]  # 3x (BtC, HW)
    groups.append(jnp.mean(x, axis=1))                                  # full-D mean (gap1)
    y = jnp.concatenate(groups, axis=0)                                 # (4*BtC, HW)

    # --- adaptive pooling, H/W axes: one MXU matmul (gap1 col folded in) ----
    z = jnp.dot(y, phw_ref[...], preferred_element_type=f32)            # (4*BtC, 10)

    gap3 = jnp.concatenate([z[0 * btc:1 * btc, 0:9],
                            z[1 * btc:2 * btc, 0:9],
                            z[2 * btc:3 * btc, 0:9]], axis=1)           # (BtC, 27), (d,h,w)
    gap1 = z[3 * btc:4 * btc, 9:10]                                     # (BtC, 1)

    g3 = gap3.reshape(bt, c, 27)
    g1 = gap1.reshape(bt, c, 1)

    # --- Conv3d(2C -> S, k=1) with the gap1 half of w1 folded in (no concat)
    w1a = jnp.broadcast_to(w1a_ref[...], (bt, s, c))
    w1b = jnp.broadcast_to(w1b_ref[...], (bt, s, c))
    h1 = (jnp.einsum('bsc,bcp->bsp', w1b, g3, preferred_element_type=f32)
          + jnp.einsum('bsc,bcp->bsp', w1a, g1, preferred_element_type=f32))
    h1 = jnp.maximum(h1, 0.0)                                           # (Bt, S, 27)

    # --- Conv3d(S -> S, k=3, groups=S) on a 3x3x3 input: weighted sum over 27
    h2 = jnp.maximum(jnp.sum(h1 * wd_ref[...][None, :, :], axis=2), 0.0)  # (Bt, S)

    # --- Conv3d(S -> E*O, k=1) + sigmoid ------------------------------------
    out = jnp.dot(h2, w3t_ref[...], preferred_element_type=f32)          # (Bt, EO)
    o_ref[0] = 1.0 / (1.0 + jnp.exp(-out))


# ----------------------------------------------------------------------------
# Wrapper
# ----------------------------------------------------------------------------
def _route_func3d_pallas(x, w1, wd, w3, *, bt_target=16):
    """x: (B, C, D, H, W) float. Returns (B, num_experts*out_channels, 1, 1, 1)."""
    b, c, d, h, w = x.shape
    s = w1.shape[0]
    eo = w3.shape[0]
    hw = h * w

    # Batch tile: amortize per-step overhead but keep >=2 grid steps so both
    # v7x TensorCores are used.  (Lower bt_target for very large D*H*W.)
    bt = max(1, min(bt_target, b // 2))
    steps = -(-b // bt)
    bp = steps * bt

    xq = x.astype(jnp.bfloat16)                       # halve HBM traffic of the big operand
    if bp != b:
        xq = jnp.pad(xq, ((0, bp - b), (0, 0), (0, 0), (0, 0), (0, 0)))
    xr = xq.reshape(bp * c, d, hw)                    # layout-preserving reshape only

    phw_ext = jnp.asarray(_hw_pool_matrix_ext(h, w))
    d_bins = _adaptive_pool_bins(d, 3)

    w1a = w1[:, :c].astype(jnp.float32)               # acts on the gap1 channels
    w1b = w1[:, c:].astype(jnp.float32)               # acts on the gap3 channels
    wdf = wd.astype(jnp.float32)
    w3t = w3.T.astype(jnp.float32)

    kernel = functools.partial(_route_kernel, bt=bt, c=c, s=s, d_bins=d_bins)

    out3 = pl.pallas_call(
        kernel,
        out_shape=jax.ShapeDtypeStruct((steps, bt, eo), jnp.float32),
        grid_spec=pltpu.PrefetchScalarGridSpec(
            num_scalar_prefetch=0,
            grid=(steps,),
            in_specs=[
                pl.BlockSpec((bt * c, d, hw), lambda i: (i, 0, 0)),
                pl.BlockSpec((hw, 10), lambda i: (0, 0)),
                pl.BlockSpec((s, c), lambda i: (0, 0)),
                pl.BlockSpec((s, c), lambda i: (0, 0)),
                pl.BlockSpec((s, 27), lambda i: (0, 0)),
                pl.BlockSpec((s, eo), lambda i: (0, 0)),
            ],
            out_specs=pl.BlockSpec((1, bt, eo), lambda i: (i, 0, 0)),
        ),
        compiler_params=pltpu.CompilerParams(dimension_semantics=("parallel",)),
    )(xr, phw_ext, w1a, w1b, wdf, w3t)

    return out3.reshape(bp, eo)[:b].reshape(b, eo, 1, 1, 1)


route_func3d_pallas = jax.jit(_route_func3d_pallas, static_argnames=("bt_target",))


# ----------------------------------------------------------------------------
# Plain-JAX reference (mirrors the PyTorch forward, sigmoid branch)
# ----------------------------------------------------------------------------
def route_func3d_reference(x, w1, wd, w3):
    b, c, d, h, w = x.shape
    hi = jax.lax.Precision.HIGHEST
    pd = jnp.asarray(_adaptive_pool_matrix(d, 3))
    ph = jnp.asarray(_adaptive_pool_matrix(h, 3))
    pw = jnp.asarray(_adaptive_pool_matrix(w, 3))
    a3 = jnp.einsum('bcdhw,id,jh,kw->bcijk', x, pd, ph, pw, precision=hi)   # (b,c,3,3,3)
    a1 = jnp.broadcast_to(jnp.mean(x, axis=(2, 3, 4), keepdims=True), a3.shape)
    att = jnp.concatenate([a1, a3], axis=1).reshape(b, 2 * c, 27)
    h1 = jnp.maximum(jnp.einsum('sc,bcp->bsp', w1, att, precision=hi), 0.0)
    h2 = jnp.maximum(jnp.sum(wd[None] * h1, axis=2), 0.0)
    out = jnp.einsum('os,bs->bo', w3, h2, precision=hi)
    return (1.0 / (1.0 + jnp.exp(-out))).reshape(b, -1, 1, 1, 1)


if __name__ == "__main__":
    # Module config: in_channels=4, out_channels=4, num_experts=3, reduction=16
    in_channels = 4
    out_channels = 4
    num_experts = 3
    reduction = 16
    squeeze_channels = max(in_channels // reduction, reduction)   # 16
    eo = num_experts * out_channels                               # 12
    D = H = W = 8

    key = jax.random.PRNGKey(0)
    kx, k1, k2, k3, kx2 = jax.random.split(key, 5)

    # Conv weights with kernel-size-1 dims dropped; depthwise 3x3x3 kernel
    # flattened to 27 in (d, h, w) row-major order.
    w1 = 0.1 * jax.random.normal(k1, (squeeze_channels, 2 * in_channels), dtype=jnp.float32)
    wd = 0.1 * jax.random.normal(k2, (squeeze_channels, 27), dtype=jnp.float32)
    w3 = 0.1 * jax.random.normal(k3, (eo, squeeze_channels), dtype=jnp.float32)

    # batch=2 exercises Bt=1 (2 grid steps); batch=5 exercises Bt=2 + padding.
    for bkey, batch in ((kx, 2), (kx2, 5)):
        x = jax.random.normal(bkey, (batch, in_channels, D, H, W), dtype=jnp.float32)

        out = jax.block_until_ready(route_func3d_pallas(x, w1, wd, w3))

        # The kernel streams x as bfloat16; compare against a float32 reference
        # evaluated on the identically-rounded input.
        xq = x.astype(jnp.bfloat16).astype(jnp.float32)
        ref = route_func3d_reference(xq, w1, wd, w3)

        assert out.shape == (batch, eo, 1, 1, 1), out.shape
        err = np.max(np.abs(np.asarray(out) - np.asarray(ref)))
        assert np.allclose(np.asarray(out), np.asarray(ref), rtol=1e-3, atol=1e-3), err

    print("KERNEL_OK")
</pallas_src>

<mosaic_0001>
module attributes {stable_mosaic.version = 11 : i64} {
  func.func @_route_kernel(%arg0: i32, %arg1: memref<4x8x64xbf16, #tpu.memory_space<vmem>>, %arg2: memref<64x10xf32, #tpu.memory_space<vmem>>, %arg3: memref<16x4xf32, #tpu.memory_space<vmem>>, %arg4: memref<16x4xf32, #tpu.memory_space<vmem>>, %arg5: memref<16x27xf32, #tpu.memory_space<vmem>>, %arg6: memref<16x12xf32, #tpu.memory_space<vmem>>, %arg7: memref<1x1x12xf32, #tpu.memory_space<vmem>>) attributes {dimension_semantics = [#tpu.dimension_semantics<parallel>], iteration_bounds = array<i64: 2>, scalar_prefetch = 0 : i64, scratch_operands = 0 : i64, tpu.core_type = #tpu.core_type<tc>, window_params = [{transform_indices = @transform_0, window_bounds = array<i64: 4, 8, 64>}, {pipeline_mode = #tpu.pipeline_mode<synchronous>, transform_indices = @transform_1, window_bounds = array<i64: 64, 10>}, {pipeline_mode = #tpu.pipeline_mode<synchronous>, transform_indices = @transform_2, window_bounds = array<i64: 16, 4>}, {pipeline_mode = #tpu.pipeline_mode<synchronous>, transform_indices = @transform_3, window_bounds = array<i64: 16, 4>}, {pipeline_mode = #tpu.pipeline_mode<synchronous>, transform_indices = @transform_4, window_bounds = array<i64: 16, 27>}, {pipeline_mode = #tpu.pipeline_mode<synchronous>, transform_indices = @transform_5, window_bounds = array<i64: 16, 12>}, {transform_indices = @transform_6, window_bounds = array<i64: 1, 1, 12>}]} {
    %c0 = arith.constant 0 : index
    %c0_0 = arith.constant 0 : index
    %c0_1 = arith.constant 0 : index
    %0 = vector.load %arg1[%c0, %c0_0, %c0_1] : memref<4x8x64xbf16, #tpu.memory_space<vmem>>, vector<4x8x64xbf16>
    %1 = arith.extf %0 : vector<4x8x64xbf16> to vector<4x8x64xf32>
    %2 = vector.extract_strided_slice %1 {offsets = [0, 0, 0], sizes = [4, 3, 64], strides = [1, 1, 1]} : vector<4x8x64xf32> to vector<4x3x64xf32>
    %cst = arith.constant dense<0.000000e+00> : vector<4x64xf32>
    %3 = vector.multi_reduction <add>, %2, %cst [1] : vector<4x3x64xf32> to vector<4x64xf32>
    %cst_2 = arith.constant 3.000000e+00 : f32
    %4 = vector.broadcast %cst_2 : f32 to vector<4x64xf32>
    %5 = arith.divf %3, %4 : vector<4x64xf32>
    %6 = vector.extract_strided_slice %1 {offsets = [0, 2, 0], sizes = [4, 4, 64], strides = [1, 1, 1]} : vector<4x8x64xf32> to vector<4x4x64xf32>
    %cst_3 = arith.constant dense<0.000000e+00> : vector<4x64xf32>
    %7 = vector.multi_reduction <add>, %6, %cst_3 [1] : vector<4x4x64xf32> to vector<4x64xf32>
    %cst_4 = arith.constant 4.000000e+00 : f32
    %8 = vector.broadcast %cst_4 : f32 to vector<4x64xf32>
    %9 = arith.divf %7, %8 : vector<4x64xf32>
    %10 = vector.extract_strided_slice %1 {offsets = [0, 5, 0], sizes = [4, 3, 64], strides = [1, 1, 1]} : vector<4x8x64xf32> to vector<4x3x64xf32>
    %cst_5 = arith.constant dense<0.000000e+00> : vector<4x64xf32>
    %11 = vector.multi_reduction <add>, %10, %cst_5 [1] : vector<4x3x64xf32> to vector<4x64xf32>
    %cst_6 = arith.constant 3.000000e+00 : f32
    %12 = vector.broadcast %cst_6 : f32 to vector<4x64xf32>
    %13 = arith.divf %11, %12 : vector<4x64xf32>
    %cst_7 = arith.constant dense<0.000000e+00> : vector<4x64xf32>
    %14 = vector.multi_reduction <add>, %1, %cst_7 [1] : vector<4x8x64xf32> to vector<4x64xf32>
    %cst_8 = arith.constant 8.000000e+00 : f32
    %15 = vector.broadcast %cst_8 : f32 to vector<4x64xf32>
    %16 = arith.divf %14, %15 : vector<4x64xf32>
    %17 = tpu.concatenate %5, %9, %13, %16 in 0 : vector<4x64xf32>, vector<4x64xf32>, vector<4x64xf32>, vector<4x64xf32> -> vector<16x64xf32>
    %c0_9 = arith.constant 0 : index
    %c0_10 = arith.constant 0 : index
    %18 = vector.load %arg2[%c0_9, %c0_10] : memref<64x10xf32, #tpu.memory_space<vmem>>, vector<64x10xf32>
    %cst_11 = arith.constant dense<0.000000e+00> : vector<16x10xf32>
    %19 = tpu.matmul %17, %18, %cst_11 {dimension_numbers = #tpu.dot_dimension_numbers<[1], [0], [0], [1], [0, 0, 1, 1], [], []>} : vector<16x64xf32>, vector<64x10xf32>, vector<16x10xf32> -> vector<16x10xf32>
    %20 = vector.extract_strided_slice %19 {offsets = [0, 0], sizes = [4, 9], strides = [1, 1]} : vector<16x10xf32> to vector<4x9xf32>
    %21 = vector.extract_strided_slice %19 {offsets = [4, 0], sizes = [4, 9], strides = [1, 1]} : vector<16x10xf32> to vector<4x9xf32>
    %22 = vector.extract_strided_slice %19 {offsets = [8, 0], sizes = [4, 9], strides = [1, 1]} : vector<16x10xf32> to vector<4x9xf32>
    %23 = tpu.concatenate %20, %21, %22 in 1 : vector<4x9xf32>, vector<4x9xf32>, vector<4x9xf32> -> vector<4x27xf32>
    %24 = vector.extract_strided_slice %19 {offsets = [12, 9], sizes = [4, 1], strides = [1, 1]} : vector<16x10xf32> to vector<4x1xf32>
    %25 = vector.shape_cast %23 : vector<4x27xf32> to vector<1x4x27xf32>
    %26 = vector.shape_cast %24 : vector<4x1xf32> to vector<1x4x1xf32>
    %c0_12 = arith.constant 0 : index
    %c0_13 = arith.constant 0 : index
    %27 = vector.load %arg3[%c0_12, %c0_13] : memref<16x4xf32, #tpu.memory_space<vmem>>, vector<16x4xf32>
    %28 = vector.shape_cast %27 : vector<16x4xf32> to vector<1x16x4xf32>
    %c0_14 = arith.constant 0 : index
    %c0_15 = arith.constant 0 : index
    %29 = vector.load %arg4[%c0_14, %c0_15] : memref<16x4xf32, #tpu.memory_space<vmem>>, vector<16x4xf32>
    %30 = vector.shape_cast %29 : vector<16x4xf32> to vector<1x16x4xf32>
    "tpu.trace_start"() <{level = 10 : i32, message = "bsc,bcp->bsp"}> : () -> ()
    %cst_16 = arith.constant dense<0.000000e+00> : vector<1x16x27xf32>
    %31 = tpu.matmul %30, %25, %cst_16 {dimension_numbers = #tpu.dot_dimension_numbers<[2], [1], [1], [2], [0, 0, 0, 1, 1, 2], [0], [0]>} : vector<1x16x4xf32>, vector<1x4x27xf32>, vector<1x16x27xf32> -> vector<1x16x27xf32>
    %cst_17 = arith.constant dense<0.000000e+00> : vector<1x16x1xf32>
    %32 = tpu.matmul %28, %26, %cst_17 {dimension_numbers = #tpu.dot_dimension_numbers<[2], [1], [1], [2], [0, 0, 0, 1, 1, 2], [0], [0]>} : vector<1x16x4xf32>, vector<1x4x1xf32>, vector<1x16x1xf32> -> vector<1x16x1xf32>
    "tpu.trace_stop"() : () -> ()
    %33 = vector.broadcast %32 : vector<1x16x1xf32> to vector<1x16x27xf32>
    %34 = arith.addf %31, %33 : vector<1x16x27xf32>
    %cst_18 = arith.constant 0.000000e+00 : f32
    %35 = vector.broadcast %cst_18 : f32 to vector<1x16x27xf32>
    %36 = arith.maximumf %34, %35 : vector<1x16x27xf32>
    %c0_19 = arith.constant 0 : index
    %c0_20 = arith.constant 0 : index
    %37 = vector.load %arg5[%c0_19, %c0_20] : memref<16x27xf32, #tpu.memory_space<vmem>>, vector<16x27xf32>
    %38 = vector.shape_cast %37 : vector<16x27xf32> to vector<1x16x27xf32>
    %39 = arith.mulf %36, %38 : vector<1x16x27xf32>
    %cst_21 = arith.constant dense<0.000000e+00> : vector<1x16xf32>
    %40 = vector.multi_reduction <add>, %39, %cst_21 [2] : vector<1x16x27xf32> to vector<1x16xf32>
    %cst_22 = arith.constant 0.000000e+00 : f32
    %41 = vector.broadcast %cst_22 : f32 to vector<1x16xf32>
    %42 = arith.maximumf %40, %41 : vector<1x16xf32>
    %c0_23 = arith.constant 0 : index
    %c0_24 = arith.constant 0 : index
    %43 = vector.load %arg6[%c0_23, %c0_24] : memref<16x12xf32, #tpu.memory_space<vmem>>, vector<16x12xf32>
    %cst_25 = arith.constant dense<0.000000e+00> : vector<1x12xf32>
    %44 = tpu.matmul %42, %43, %cst_25 {dimension_numbers = #tpu.dot_dimension_numbers<[1], [0], [0], [1], [0, 0, 1, 1], [], []>} : vector<1x16xf32>, vector<16x12xf32>, vector<1x12xf32> -> vector<1x12xf32>
    %cst_26 = arith.constant 0.000000e+00 : f32
    %45 = vector.broadcast %cst_26 : f32 to vector<1x12xf32>
    %46 = arith.subf %45, %44 : vector<1x12xf32>
    %47 = math.exp %46 : vector<1x12xf32>
    %cst_27 = arith.constant 1.000000e+00 : f32
    %48 = vector.broadcast %cst_27 : f32 to vector<1x12xf32>
    %49 = arith.addf %48, %47 : vector<1x12xf32>
    %cst_28 = arith.constant 1.000000e+00 : f32
    %50 = vector.broadcast %cst_28 : f32 to vector<1x12xf32>
    %51 = arith.divf %50, %49 : vector<1x12xf32>
    %c0_29 = arith.constant 0 : index
    %c0_30 = arith.constant 0 : index
    %c0_31 = arith.constant 0 : index
    %52 = vector.load %arg7[%c0_29, %c0_30, %c0_31] : memref<1x1x12xf32, #tpu.memory_space<vmem>>, vector<1x1x12xf32>
    %53 = vector.shape_cast %52 : vector<1x1x12xf32> to vector<1x12xf32>
    %54 = vector.shape_cast %51 : vector<1x12xf32> to vector<1x1x12xf32>
    tpu.vector_store %arg7[%c0_29, %c0_30, %c0_31], %54 {strides = array<i32>} : memref<1x1x12xf32, #tpu.memory_space<vmem>>, vector<1x1x12xf32>,
    return
  }
  func.func @transform_0(%arg0: i32) -> (i32, i32, i32) {
    %c0_i32 = arith.constant 0 : i32
    %c0_i32_0 = arith.constant 0 : i32
    %c0_i32_1 = arith.constant 0 : i32
    return %arg0, %c0_i32, %c0_i32_0 : i32, i32, i32
  }
  func.func @transform_1(%arg0: i32) -> (i32, i32) {
    %c0_i32 = arith.constant 0 : i32
    %c0_i32_0 = arith.constant 0 : i32
    %c0_i32_1 = arith.constant 0 : i32
    return %c0_i32, %c0_i32_0 : i32, i32
  }
  func.func @transform_2(%arg0: i32) -> (i32, i32) {
    %c0_i32 = arith.constant 0 : i32
    %c0_i32_0 = arith.constant 0 : i32
    %c0_i32_1 = arith.constant 0 : i32
    return %c0_i32, %c0_i32_0 : i32, i32
  }
  func.func @transform_3(%arg0: i32) -> (i32, i32) {
    %c0_i32 = arith.constant 0 : i32
    %c0_i32_0 = arith.constant 0 : i32
    %c0_i32_1 = arith.constant 0 : i32
    return %c0_i32, %c0_i32_0 : i32, i32
  }
  func.func @transform_4(%arg0: i32) -> (i32, i32) {
    %c0_i32 = arith.constant 0 : i32
    %c0_i32_0 = arith.constant 0 : i32
    %c0_i32_1 = arith.constant 0 : i32
    return %c0_i32, %c0_i32_0 : i32, i32
  }
  func.func @transform_5(%arg0: i32) -> (i32, i32) {
    %c0_i32 = arith.constant 0 : i32
    %c0_i32_0 = arith.constant 0 : i32
    %c0_i32_1 = arith.constant 0 : i32
    return %c0_i32, %c0_i32_0 : i32, i32
  }
  func.func @transform_6(%arg0: i32) -> (i32, i32, i32) {
    %c0_i32 = arith.constant 0 : i32
    %c0_i32_0 = arith.constant 0 : i32
    %c0_i32_1 = arith.constant 0 : i32
    return %arg0, %c0_i32, %c0_i32_0 : i32, i32, i32
  }
}

</mosaic_0001>

<llo_original>
// kernel: _route_func3d_pallas.1
$region0: #{_route_func3d_pallas.1}
  #allocation0 [shape = 'u32[]', space=smem, size = 0x4, offset = 0x4, fixed_abs, tag = 'smem constant byte address 0x4 - core index']
  #allocation1 [shape = 'u32[144,128]{1,0:T(1,128)}', space=vmem, size = 0x12000, scoped, tag = 'internal scratch']
  %s0 = inlined_call_operand.vmem [shape: bf16[8,8,64], index: 0, kind: input, shape index: {}]
  %s1 = inlined_call_operand.vmem [shape: f32[64,10], index: 1, kind: input, shape index: {}]
  %s2 = inlined_call_operand.vmem [shape: f32[16,4], index: 2, kind: input, shape index: {}]
  %s3 = inlined_call_operand.vmem [shape: f32[16,4], index: 3, kind: input, shape index: {}]
  %s4 = inlined_call_operand.vmem [shape: f32[16,27], index: 4, kind: input, shape index: {}]
  %s5 = inlined_call_operand.vmem [shape: f32[16,12], index: 5, kind: input, shape index: {}]
  %s6 = inlined_call_operand.hbm [shape: f32[2,1,12], index: 6, kind: output, shape index: {}]
  %s7 = sld [smem:[#allocation0]]
  $region57: #{_route_func3d_pallas.1} parent=0
    _
  %s9 = ssub.s32 1, %s7
  %s10 = scalar_select 0, %s9, %s7
  $region1: #{_route_func3d_pallas.1} parent=0
    #allocation2 [shape = 'u8[1024]{0}', space=vmem, size = 0x400, scoped, tag = 'output window, operand 0']
    #allocation3 [shape = 's32[2]{0}', space=sflag, size = 0x8, scoped, tag = 'scoped memory for _route_func3d_pallas.1']
    %11 = vsyncpa [#allocation3], 0
    %s12 = scalar_lea.sflag [#allocation3], 1
    %13 = vsyncpa %s12, 0
    loop: start=0, step=1, limit=4
    $region2: #{_route_func3d_pallas.1} parent=1 // loop_pre_header
      _
    $region3: #{_route_func3d_pallas.1} parent=1 // loop_header
      %s15 = sphi 0, %s19
      %p16 = scmp.ge.s32.totalorder %s15, 4
      %s25 = sphi 0, %s27
      %s28 = sphi 0, %s25
      %s29 = sphi 0, %s28
      %s45 = sphi 0, %s29
      %s49 = sphi 0, %s49
      %s51 = sphi 0, %s49
      %s52 = sphi 0, %s51
      %s66 = sphi 0, %s52
      %s70 = sphi 0, %s70
      %s72 = sphi 0, %s70
      %s73 = sphi 0, %s72
      %s87 = sphi 0, %s73
      %s91 = sphi 0, %s91
      %s93 = sphi 0, %s91
      %s94 = sphi 0, %s93
      %s108 = sphi 0, %s94
      %s112 = sphi 0, %s112
      %s114 = sphi 0, %s112
      %s115 = sphi 0, %s114
      %s129 = sphi 0, %s115
      %s133 = sphi 0, %s133
      %s135 = sphi 0, %s133
      %s136 = sphi 0, %s135
      %s150 = sphi 0, %s136
      %s156 = sphi 0, %s158
      %s159 = sphi 0, %s156
      %s160 = sphi 0, %s159
      %s176 = sphi 0, %s160
    $region4: #{_route_func3d_pallas.1} parent=1 // loop_header_branch
      %18 = sbr.rel (%p16) target = $region8
    $region5: #{_route_func3d_pallas.1} parent=1 // loop_body
      %s20 = ssub.s32 %s15, 1
      %s21 = ssub.s32 %s15, 2
      %s22 = sadd.s32 %s15, 1
      %s23 = ssub.s32 %s15, %s22
      %p24 = scmp.eq.s32.totalorder %s23, 0
      %s26 = sadd.s32 %s25, 1
      %s27 = scalar_select %p24, %s25, %s26
      %p30 = pneg %p24
      %p31 = scmp.eq.s32.totalorder %s15, 1
      %p32 = por %p30, %p31
      %p33 = scmp.ne.s32.totalorder %s25, %s28
      %p34 = scmp.eq.s32.totalorder %s15, 0
      %p35 = por %p33, %p34
      %p36 = scmp.ne.s32.totalorder %s25, %s28
      %p37 = scmp.eq.s32.totalorder %s20, 1
      %p38 = por %p36, %p37
      %p39 = scmp.ne.s32.totalorder %s28, %s29
      %p40 = scmp.eq.s32.totalorder %s20, 0
      %p41 = por %p39, %p40
      %p42 = scmp.ne.s32.totalorder %s28, %s29
      %p43 = scmp.eq.s32.totalorder %s21, 1
      %p44 = por %p42, %p43
      %p46 = scmp.ne.s32.totalorder %s29, %s45
      %p47 = scmp.eq.s32.totalorder %s21, 0
      %p48 = por %p46, %p47
      %s50 = sadd.s32 %s49, 1
      %p53 = scmp.eq.s32.totalorder %s15, 1
      %p54 = scmp.ne.s32.totalorder %s49, %s51
      %p55 = scmp.eq.s32.totalorder %s15, 0
      %p56 = por %p54, %p55
      %p57 = scmp.ne.s32.totalorder %s49, %s51
      %p58 = scmp.eq.s32.totalorder %s20, 1
      %p59 = por %p57, %p58
      %p60 = scmp.ne.s32.totalorder %s51, %s52
      %p61 = scmp.eq.s32.totalorder %s20, 0
      %p62 = por %p60, %p61
      %p63 = scmp.ne.s32.totalorder %s51, %s52
      %p64 = scmp.eq.s32.totalorder %s21, 1
      %p65 = por %p63, %p64
      %p67 = scmp.ne.s32.totalorder %s52, %s66
      %p68 = scmp.eq.s32.totalorder %s21, 0
      %p69 = por %p67, %p68
      %s71 = sadd.s32 %s70, 1
      %p74 = scmp.eq.s32.totalorder %s15, 1
      %p75 = scmp.ne.s32.totalorder %s70, %s72
      %p76 = scmp.eq.s32.totalorder %s15, 0
      %p77 = por %p75, %p76
      %p78 = scmp.ne.s32.totalorder %s70, %s72
      %p79 = scmp.eq.s32.totalorder %s20, 1
      %p80 = por %p78, %p79
      %p81 = scmp.ne.s32.totalorder %s72, %s73
      %p82 = scmp.eq.s32.totalorder %s20, 0
      %p83 = por %p81, %p82
      %p84 = scmp.ne.s32.totalorder %s72, %s73
      %p85 = scmp.eq.s32.totalorder %s21, 1
      %p86 = por %p84, %p85
      %p88 = scmp.ne.s32.totalorder %s73, %s87
      %p89 = scmp.eq.s32.totalorder %s21, 0
      %p90 = por %p88, %p89
      %s92 = sadd.s32 %s91, 1
      %p95 = scmp.eq.s32.totalorder %s15, 1
      %p96 = scmp.ne.s32.totalorder %s91, %s93
      %p97 = scmp.eq.s32.totalorder %s15, 0
      %p98 = por %p96, %p97
      %p99 = scmp.ne.s32.totalorder %s91, %s93
      %p100 = scmp.eq.s32.totalorder %s20, 1
      %p101 = por %p99, %p100
      %p102 = scmp.ne.s32.totalorder %s93, %s94
      %p103 = scmp.eq.s32.totalorder %s20, 0
      %p104 = por %p102, %p103
      %p105 = scmp.ne.s32.totalorder %s93, %s94
      %p106 = scmp.eq.s32.totalorder %s21, 1
      %p107 = por %p105, %p106
      %p109 = scmp.ne.s32.totalorder %s94, %s108
      %p110 = scmp.eq.s32.totalorder %s21, 0
      %p111 = por %p109, %p110
      %s113 = sadd.s32 %s112, 1
      %p116 = scmp.eq.s32.totalorder %s15, 1
      %p117 = scmp.ne.s32.totalorder %s112, %s114
      %p118 = scmp.eq.s32.totalorder %s15, 0
      %p119 = por %p117, %p118
      %p120 = scmp.ne.s32.totalorder %s112, %s114
      %p121 = scmp.eq.s32.totalorder %s20, 1
      %p122 = por %p120, %p121
      %p123 = scmp.ne.s32.totalorder %s114, %s115
      %p124 = scmp.eq.s32.totalorder %s20, 0
      %p125 = por %p123, %p124
      %p126 = scmp.ne.s32.totalorder %s114, %s115
      %p127 = scmp.eq.s32.totalorder %s21, 1
      %p128 = por %p126, %p127
      %p130 = scmp.ne.s32.totalorder %s115, %s129
      %p131 = scmp.eq.s32.totalorder %s21, 0
      %p132 = por %p130, %p131
      %s134 = sadd.s32 %s133, 1
      %p137 = scmp.eq.s32.totalorder %s15, 1
      %p138 = scmp.ne.s32.totalorder %s133, %s135
      %p139 = scmp.eq.s32.totalorder %s15, 0
      %p140 = por %p138, %p139
      %p141 = scmp.ne.s32.totalorder %s133, %s135
      %p142 = scmp.eq.s32.totalorder %s20, 1
      %p143 = por %p141, %p142
      %p144 = scmp.ne.s32.totalorder %s135, %s136
      %p145 = scmp.eq.s32.totalorder %s20, 0
      %p146 = por %p144, %p145
      %p147 = scmp.ne.s32.totalorder %s135, %s136
      %p148 = scmp.eq.s32.totalorder %s21, 1
      %p149 = por %p147, %p148
      %p151 = scmp.ne.s32.totalorder %s136, %s150
      %p152 = scmp.eq.s32.totalorder %s21, 0
      %p153 = por %p151, %p152
      %s154 = ssub.s32 %s15, %s22
      %p155 = scmp.eq.s32.totalorder %s154, 0
      %s157 = sadd.s32 %s156, 1
      %s158 = scalar_select %p155, %s156, %s157
      %p161 = pneg %p155
      %p162 = scmp.eq.s32.totalorder %s15, 1
      %p163 = por %p161, %p162
      %p164 = scmp.ne.s32.totalorder %s156, %s159
      %p165 = scmp.eq.s32.totalorder %s15, 0
      %p166 = por %p164, %p165
      %p167 = scmp.ne.s32.totalorder %s156, %s159
      %p168 = scmp.eq.s32.totalorder %s20, 1
      %p169 = por %p167, %p168
      %p170 = scmp.ne.s32.totalorder %s159, %s160
      %p171 = scmp.eq.s32.totalorder %s20, 0
      %p172 = por %p170, %p171
      %p173 = scmp.ne.s32.totalorder %s159, %s160
      %p174 = scmp.eq.s32.totalorder %s21, 1
      %p175 = por %p173, %p174
      %p177 = scmp.ne.s32.totalorder %s160, %s176
      %p178 = scmp.eq.s32.totalorder %s21, 0
      %p179 = por %p177, %p178
      %p180 = scmp.le.s32.totalorder 1, %s15
      %p181 = scmp.lt.s32.totalorder %s15, 3
      %p182 = pnand %p180, %p181
      %p183 = pneg %p182
      // Predicated region
      $region9: #{_route_func3d_pallas.1} parent=5 // pred_check
        _
      $region10: #{_route_func3d_pallas.1} parent=5 // pred_check_branch
        %185 = sbr.rel (%p182) target = $region12
      $region11: #{_route_func3d_pallas.1} parent=5 // pred_region
        %s186 = ssub.s32 %s15, 1
        // Predicated region
        $region13: #{_route_func3d_pallas.1} parent=11 // pred_check
          %p187 = pneg %p62
        $region14: #{_route_func3d_pallas.1} parent=11 // pred_check_branch
          %189 = sbr.rel (%p187) target = $region16
        $region15: #{_route_func3d_pallas.1} parent=11 // pred_region
          _
        $region16: #{_route_func3d_pallas.1} parent=11 // pred_fallthru
          _
        // Predicated region
        $region17: #{_route_func3d_pallas.1} parent=11 // pred_check
          %p190 = pneg %p83
        $region18: #{_route_func3d_pallas.1} parent=11 // pred_check_branch
          %192 = sbr.rel (%p190) target = $region20
        $region19: #{_route_func3d_pallas.1} parent=11 // pred_region
          _
        $region20: #{_route_func3d_pallas.1} parent=11 // pred_fallthru
          _
        // Predicated region
        $region21: #{_route_func3d_pallas.1} parent=11 // pred_check
          %p193 = pneg %p104
        $region22: #{_route_func3d_pallas.1} parent=11 // pred_check_branch
          %195 = sbr.rel (%p193) target = $region24
        $region23: #{_route_func3d_pallas.1} parent=11 // pred_region
          _
        $region24: #{_route_func3d_pallas.1} parent=11 // pred_fallthru
          _
        // Predicated region
        $region25: #{_route_func3d_pallas.1} parent=11 // pred_check
          %p196 = pneg %p125
        $region26: #{_route_func3d_pallas.1} parent=11 // pred_check_branch
          %198 = sbr.rel (%p196) target = $region28
        $region27: #{_route_func3d_pallas.1} parent=11 // pred_region
          _
        $region28: #{_route_func3d_pallas.1} parent=11 // pred_fallthru
          _
        // Predicated region
        $region29: #{_route_func3d_pallas.1} parent=11 // pred_check
          %p199 = pneg %p146
        $region30: #{_route_func3d_pallas.1} parent=11 // pred_check_branch
          %201 = sbr.rel (%p199) target = $region32
        $region31: #{_route_func3d_pallas.1} parent=11 // pred_region
          _
        $region32: #{_route_func3d_pallas.1} parent=11 // pred_fallthru
          _
      $region12: #{_route_func3d_pallas.1} parent=5 // pred_fallthru
        _
      %p202 = scmp.lt.s32.totalorder %s15, 2
      // Predicated region
      $region33: #{_route_func3d_pallas.1} parent=5 // pred_check
        %p203 = pneg %p202
      $region34: #{_route_func3d_pallas.1} parent=5 // pred_check_branch
        %205 = sbr.rel (%p203) target = $region36
      $region35: #{_route_func3d_pallas.1} parent=5 // pred_region
        // Predicated region
        $region37: #{_route_func3d_pallas.1} parent=35 // pred_check
          %p206 = pneg %p35
        $region38: #{_route_func3d_pallas.1} parent=35 // pred_check_branch
          %208 = sbr.rel (%p206) target = $region40
        $region39: #{_route_func3d_pallas.1} parent=35 // pred_region
          %s209 = smul.u32 4, %s15
          %p210 = scmp.lt.s32.totalorder %s209, 7
          %s211 = scalar_select %p210, %s209, 7
          %s212 = smul.addr %s211, 4
          %s213 = scalar_lea.vmem %s0, %s212
          %s214 = smul.u32 4, %s15
        $region40: #{_route_func3d_pallas.1} parent=35 // pred_fallthru
          _
      $region36: #{_route_func3d_pallas.1} parent=5 // pred_fallthru
        _
      %p215 = scmp.le.s32.totalorder 1, %s15
      %p216 = scmp.lt.s32.totalorder %s15, 3
      %p217 = pnand %p215, %p216
      %p218 = pneg %p217
      // Predicated region
      $region41: #{_route_func3d_pallas.1} parent=5 // pred_check
        _
      $region42: #{_route_func3d_pallas.1} parent=5 // pred_check_branch
        %220 = sbr.rel (%p217) target = $region44
      $region43: #{_route_func3d_pallas.1} parent=5 // pred_region
        %s221 = ssub.s32 %s15, 1
        %s222 = smul.u32 4, %s20
        %p223 = scmp.lt.s32.totalorder %s222, 7
        %s224 = scalar_select %p223, %s222, 7
        %s225 = smul.addr %s224, 4
        %s226 = scalar_lea.vmem %s0, %s225
        %p227 = pneg %p41
        %p228 = pneg %p38
        %p229 = pneg %p62
        %p230 = pneg %p59
        %p231 = pneg %p83
        %p232 = pneg %p80
        %p233 = pneg %p104
        %p234 = pneg %p101
        %p235 = pneg %p125
        %p236 = pneg %p122
        %p237 = pneg %p146
        %p238 = pneg %p143
        %p239 = pneg %p172
        %p240 = pneg %p169
        %s241 = sand.u32 %s159, 1
        %s242 = scalar_lea.sflag [#allocation3], %s241
        %s243 = sand.u32 %s159, 1
        %s244 = scalar_lea.vmem [#allocation2], %s243
        %s245 = smul.u32 4, %s20
        %p246 = scmp.lt.s32.totalorder %s245, 7
        %s247 = scalar_select %p246, %s245, 7
        %s248 = smul.addr %s247, 4
        %s249 = scalar_lea.vmem %s0, %s248
        %s250 = smul.u32 4, %s20
        %v251 = vld [vmem:[%s249] sm:$0xf]
        %v252 = vld [vmem:[%s249 + $0x4] sm:$0xf]
        %v253 = vld [vmem:[%s249 + $0x8] sm:$0xf]
        %v254 = vld [vmem:[%s249 + $0xc] sm:$0xf]
        %v255 = vunpack.c.l.bf16 %v251
        %v256 = vunpack.c.l.bf16 %v252
        %v257 = vunpack.c.l.bf16 %v253
        %v258 = vunpack.c.l.bf16 %v254
        %vm259 = vcmask 518144
        %v260 = vsel %vm259, %v255, 0.0
        %v261 = vrot.slane %v260, 4
        %v262 = vadd.f32 %v260, %v261
        %v263 = vrot.slane %v262, 2
        %v264 = vadd.f32 %v262, %v263
        %v265 = vrot.slane %v264, 1
        %v266 = vadd.f32 %v264, %v265
        %v267 = vsel %vm259, %v256, 0.0
        %v268 = vrot.slane %v267, 4
        %v269 = vadd.f32 %v267, %v268
        %v270 = vrot.slane %v269, 2
        %v271 = vadd.f32 %v269, %v270
        %v272 = vrot.slane %v271, 1
        %v273 = vadd.f32 %v271, %v272
        %v274 = vsel %vm259, %v257, 0.0
        %v275 = vrot.slane %v274, 4
        %v276 = vadd.f32 %v274, %v275
        %v277 = vrot.slane %v276, 2
        %v278 = vadd.f32 %v276, %v277
        %v279 = vrot.slane %v278, 1
        %v280 = vadd.f32 %v278, %v279
        %v281 = vsel %vm259, %v258, 0.0
        %v282 = vrot.slane %v281, 4
        %v283 = vadd.f32 %v281, %v282
        %v284 = vrot.slane %v283, 2
        %v285 = vadd.f32 %v283, %v284
        %v286 = vrot.slane %v285, 1
        %v287 = vadd.f32 %v285, %v286
        %v288 = vrcp.pop 3.0
        %v289 = vmul.f32 %v266, %v288
        %v290 = vmul.f32 %v273, %v288
        %v291 = vmul.f32 %v280, %v288
        %v292 = vmul.f32 %v287, %v288
        %v297 = vrot.slane %v255, 2
        %v298 = vrot.slane %v256, 2
        %v299 = vrot.slane %v257, 2
        %v300 = vrot.slane %v258, 2
        %vm305 = vcmask 519168
        %v306 = vsel %vm305, %v297, 0.0
        %v307 = vrot.slane %v306, 4
        %v308 = vadd.f32 %v306, %v307
        %v309 = vrot.slane %v308, 2
        %v310 = vadd.f32 %v308, %v309
        %v311 = vrot.slane %v310, 1
        %v312 = vadd.f32 %v310, %v311
        %v313 = vsel %vm305, %v298, 0.0
        %v314 = vrot.slane %v313, 4
        %v315 = vadd.f32 %v313, %v314
        %v316 = vrot.slane %v315, 2
        %v317 = vadd.f32 %v315, %v316
        %v318 = vrot.slane %v317, 1
        %v319 = vadd.f32 %v317, %v318
        %v320 = vsel %vm305, %v299, 0.0
        %v321 = vrot.slane %v320, 4
        %v322 = vadd.f32 %v320, %v321
        %v323 = vrot.slane %v322, 2
        %v324 = vadd.f32 %v322, %v323
        %v325 = vrot.slane %v324, 1
        %v326 = vadd.f32 %v324, %v325
        %v327 = vsel %vm305, %v300, 0.0
        %v328 = vrot.slane %v327, 4
        %v329 = vadd.f32 %v327, %v328
        %v330 = vrot.slane %v329, 2
        %v331 = vadd.f32 %v329, %v330
        %v332 = vrot.slane %v331, 1
        %v333 = vadd.f32 %v331, %v332
        %v334 = vrcp.pop 4.0
        %v335 = vmul.f32 %v312, %v334
        %v336 = vmul.f32 %v319, %v334
        %v337 = vmul.f32 %v326, %v334
        %v338 = vmul.f32 %v333, %v334
        %v339 = vrot.slane %v255, 5
        %v340 = vrot.slane %v256, 5
        %v341 = vrot.slane %v257, 5
        %v342 = vrot.slane %v258, 5
        %v347 = vsel %vm259, %v339, 0.0
        %v348 = vrot.slane %v347, 4
        %v349 = vadd.f32 %v347, %v348
        %v350 = vrot.slane %v349, 2
        %v351 = vadd.f32 %v349, %v350
        %v352 = vrot.slane %v351, 1
        %v353 = vadd.f32 %v351, %v352
        %v354 = vsel %vm259, %v340, 0.0
        %v355 = vrot.slane %v354, 4
        %v356 = vadd.f32 %v354, %v355
        %v357 = vrot.slane %v356, 2
        %v358 = vadd.f32 %v356, %v357
        %v359 = vrot.slane %v358, 1
        %v360 = vadd.f32 %v358, %v359
        %v361 = vsel %vm259, %v341, 0.0
        %v362 = vrot.slane %v361, 4
        %v363 = vadd.f32 %v361, %v362
        %v364 = vrot.slane %v363, 2
        %v365 = vadd.f32 %v363, %v364
        %v366 = vrot.slane %v365, 1
        %v367 = vadd.f32 %v365, %v366
        %v368 = vsel %vm259, %v342, 0.0
        %v369 = vrot.slane %v368, 4
        %v370 = vadd.f32 %v368, %v369
        %v371 = vrot.slane %v370, 2
        %v372 = vadd.f32 %v370, %v371
        %v373 = vrot.slane %v372, 1
        %v374 = vadd.f32 %v372, %v373
        %v375 = vmul.f32 %v353, %v288
        %v376 = vmul.f32 %v360, %v288
        %v377 = vmul.f32 %v367, %v288
        %v378 = vmul.f32 %v374, %v288
        %vm379 = vcmask 523264
        %v380 = vsel %vm379, %v255, 0.0
        %v381 = vrot.slane %v380, 4
        %v382 = vadd.f32 %v380, %v381
        %v383 = vrot.slane %v382, 2
        %v384 = vadd.f32 %v382, %v383
        %v385 = vrot.slane %v384, 1
        %v386 = vadd.f32 %v384, %v385
        %v387 = vsel %vm379, %v256, 0.0
        %v388 = vrot.slane %v387, 4
        %v389 = vadd.f32 %v387, %v388
        %v390 = vrot.slane %v389, 2
        %v391 = vadd.f32 %v389, %v390
        %v392 = vrot.slane %v391, 1
        %v393 = vadd.f32 %v391, %v392
        %v394 = vsel %vm379, %v257, 0.0
        %v395 = vrot.slane %v394, 4
        %v396 = vadd.f32 %v394, %v395
        %v397 = vrot.slane %v396, 2
        %v398 = vadd.f32 %v396, %v397
        %v399 = vrot.slane %v398, 1
        %v400 = vadd.f32 %v398, %v399
        %v401 = vsel %vm379, %v258, 0.0
        %v402 = vrot.slane %v401, 4
        %v403 = vadd.f32 %v401, %v402
        %v404 = vrot.slane %v403, 2
        %v405 = vadd.f32 %v403, %v404
        %v406 = vrot.slane %v405, 1
        %v407 = vadd.f32 %v405, %v406
        %v408 = vrcp.pop 8.0
        %v409 = vmul.f32 %v386, %v408
        %v410 = vmul.f32 %v393, %v408
        %v411 = vmul.f32 %v400, %v408
        %v412 = vmul.f32 %v407, %v408
        %vm417 = vcmask 1041409
        %v418 = vsel %vm417, %v290, %v289
        %vm419 = vcmask 1042434
        %v420 = vsel %vm419, %v291, %v418
        %vm421 = vcmask 1043459
        %v422 = vsel %vm421, %v292, %v420
        %vm428 = vcmask 1045509
        %v429 = vsel %vm428, %v336, %v335
        %vm430 = vcmask 1046534
        %v431 = vsel %vm430, %v337, %v429
        %vm432 = vcmask 1047559
        %v433 = vsel %vm432, %v338, %v431
        %v439 = vsel %vm417, %v376, %v375
        %v440 = vsel %vm419, %v377, %v439
        %v441 = vsel %vm421, %v378, %v440
        %v447 = vsel %vm428, %v410, %v409
        %v448 = vsel %vm430, %v411, %v447
        %v449 = vsel %vm432, %v412, %v448
        %vm451 = vcmask 1043456
        %v452 = vsel %vm451, %v422, %v433
        %v453 = vsel %vm451, %v441, %v449
        %v454 = vld [vmem:[%s1] sm:$0xff]
        %v455 = vld [vmem:[%s1 + $0x8] sm:$0xff]
        %v456 = vld [vmem:[%s1 + $0x10] sm:$0xff]
        %v457 = vld [vmem:[%s1 + $0x18] sm:$0xff]
        %v458 = vld [vmem:[%s1 + $0x20] sm:$0xff]
        %v459 = vld [vmem:[%s1 + $0x28] sm:$0xff]
        %v460 = vld [vmem:[%s1 + $0x30] sm:$0xff]
        %v461 = vld [vmem:[%s1 + $0x38] sm:$0xff]
        %v463 = vsel %vm379, %v452, 0
        %v466 = vsel %vm379, %v453, 0
        %468 = vmatprep.subr.mxu0 0.0
        %469 = vmatpush1.msra.mxu0 %v454
        %470 = vmatprep.subr.mxu0 0.0
        %471 = vmatpush1.msra.mxu0 %v455
        %472 = vmatprep.subr.mxu0 0.0
        %473 = vmatpush1.msra.mxu0 %v456
        %474 = vmatprep.subr.mxu0 0.0
        %475 = vmatpush1.msra.mxu0 %v457
        %476 = vmatprep.subr.mxu0 0.0
        %477 = vmatpush1.msra.mxu0 %v458
        %478 = vmatprep.subr.mxu0 0.0
        %479 = vmatpush1.msra.mxu0 %v459
        %480 = vmatprep.subr.mxu0 0.0
        %481 = vmatpush1.msra.mxu0 %v460
        %482 = vmatprep.subr.mxu0 0.0
        %483 = vmatpush1.msra.mxu0 %v461
        %484 = vmatprep.subr.mxu0 0.0
        %485 = vmatpush1.msra.mxu0 0.0
        %486 = vmatprep.subr.mxu0 0.0
        %487 = vmatpush1.msra.mxu0 0.0
        %488 = vmatprep.subr.mxu0 0.0
        %489 = vmatpush1.msra.mxu0 0.0
        %490 = vmatprep.subr.mxu0 0.0
        %491 = vmatpush1.msra.mxu0 0.0
        %492 = vmatprep.subr.mxu0 0.0
        %493 = vmatpush1.msra.mxu0 0.0
        %494 = vmatprep.subr.mxu0 0.0
        %495 = vmatpush1.msra.mxu0 0.0
        %496 = vmatprep.subr.mxu0 0.0
        %497 = vmatpush1.msra.mxu0 0.0
        %498 = vmatprep.subr.mxu0 0.0
        %499 = vmatpush1.msra.mxu0 0.0
        %500 = vmatprep.subr.mxu0 0.0
        %501 = vmatpush1.msra.mxu0 0.0
        %502 = vmatprep.subr.mxu0 0.0
        %503 = vmatpush1.msra.mxu0 0.0
        %504 = vmatprep.subr.mxu0 0.0
        %505 = vmatpush1.msra.mxu0 0.0
        %506 = vmatprep.subr.mxu0 0.0
        %507 = vmatpush1.msra.mxu0 0.0
        %508 = vmatprep.subr.mxu0 0.0
        %509 = vmatpush1.msra.mxu0 0.0
        %510 = vmatprep.subr.mxu0 0.0
        %511 = vmatpush1.msra.mxu0 0.0
        %512 = vmatprep.subr.mxu0 0.0
        %513 = vmatpush1.msra.mxu0 0.0
        %514 = vmatprep.subr.mxu0 0.0
        %515 = vmatpush1.msra.mxu0 0.0
        %516 = vmatprep.subr.mxu0 0.0
        %517 = vmatpush1.msra.mxu0 0.0
        %518 = vmatprep.subr.mxu0 0.0
        %519 = vmatpush1.msra.mxu0 0.0
        %520 = vmatprep.subr.mxu0 0.0
        %521 = vmatpush1.msra.mxu0 0.0
        %522 = vmatprep.subr.mxu0 0.0
        %523 = vmatpush1.msra.mxu0 0.0
        %524 = vmatprep.subr.mxu0 0.0
        %525 = vmatpush1.msra.mxu0 0.0
        %526 = vmatprep.subr.mxu0 0.0
        %527 = vmatpush1.msra.mxu0 0.0
        %528 = vmatprep.subr.mxu0 0.0
        %529 = vmatpush1.msra.mxu0 0.0
        %530 = vmatprep.subr.mxu0 0.0
        %531 = vmatpush1.msra.mxu0 0.0
        %532 = vmatprep.mubr.f32.mxu0 0.0
        %533 = vmatmul.mubr.f32.gmra.mrb[0].mxu0 %v463
        %v534 = vpop.f32.mrb[0].mxu0
        %v535 = vadd.f32 0.0, %v534
        %v536 = vpop.f32.mrb[0].mxu0
        %537 = vmatprep.mubr.f32.mxu0 0.0
        %538 = vmatmul.mubr.f32.gmra.mrb[0].mxu0 %v466
        %v539 = vpop.f32.mrb[0].mxu0
        %v540 = vadd.f32 0.0, %v539
        %v541 = vpop.f32.mrb[0].mxu0
        %542 = vdwg.mxu0
        %v544 = vrot.slane %v535, 4
        %545 = vrot.lane.b32.xlu0 %v544, 9
        %v546 = vpop.permute.xlu0 %545
        %549 = vrot.lane.b32.xlu0 %v540, 18
        %v550 = vpop.permute.xlu0 %549
        %vm552 = vcmask 72704
        %v553 = vsel %vm552, %v535, %v546
        %vm554 = vcmask 146432
        %v555 = vsel %vm554, %v553, %v550
        %v556 = vld [vmem:[%s2] sm:$0xff]
        %v557 = vld [vmem:[%s2 + $0x8] sm:$0xff]
        %v558 = vld [vmem:[%s3] sm:$0xff]
        %v559 = vld [vmem:[%s3 + $0x8] sm:$0xff]
        %v560 = vrot.slane %v540, 4
        %561 = vrot.lane.b32.xlu0 %v560, 119
        %v562 = vpop.permute.xlu0 %561
        %vm563 = vcmask 31744
        %v565 = vsel %vm563, %v556, 0
        %v568 = vsel %vm563, %v557, 0
        %v570 = vsel %vm451, %v562, 0
        %572 = vmatprep.subr.mxu0 0.0
        %573 = vmatpush1.msra.mxu0 %v570
        %574 = vmatprep.subr.mxu0 0.0
        %575 = vmatpush1.msra.mxu0 0.0
        %576 = vmatprep.subr.mxu0 0.0
        %577 = vmatpush1.msra.mxu0 0.0
        %578 = vmatprep.subr.mxu0 0.0
        %579 = vmatpush1.msra.mxu0 0.0
        %580 = vmatprep.subr.mxu0 0.0
        %581 = vmatpush1.msra.mxu0 0.0
        %582 = vmatprep.subr.mxu0 0.0
        %583 = vmatpush1.msra.mxu0 0.0
        %584 = vmatprep.subr.mxu0 0.0
        %585 = vmatpush1.msra.mxu0 0.0
        %586 = vmatprep.subr.mxu0 0.0
        %587 = vmatpush1.msra.mxu0 0.0
        %588 = vmatprep.subr.mxu0 0.0
        %589 = vmatpush1.msra.mxu0 0.0
        %590 = vmatprep.subr.mxu0 0.0
        %591 = vmatpush1.msra.mxu0 0.0
        %592 = vmatprep.subr.mxu0 0.0
        %593 = vmatpush1.msra.mxu0 0.0
        %594 = vmatprep.subr.mxu0 0.0
        %595 = vmatpush1.msra.mxu0 0.0
        %596 = vmatprep.subr.mxu0 0.0
        %597 = vmatpush1.msra.mxu0 0.0
        %598 = vmatprep.subr.mxu0 0.0
        %599 = vmatpush1.msra.mxu0 0.0
        %600 = vmatprep.subr.mxu0 0.0
        %601 = vmatpush1.msra.mxu0 0.0
        %602 = vmatprep.subr.mxu0 0.0
        %603 = vmatpush1.msra.mxu0 0.0
        %604 = vmatprep.subr.mxu0 0.0
        %605 = vmatpush1.msra.mxu0 0.0
        %606 = vmatprep.subr.mxu0 0.0
        %607 = vmatpush1.msra.mxu0 0.0
        %608 = vmatprep.subr.mxu0 0.0
        %609 = vmatpush1.msra.mxu0 0.0
        %610 = vmatprep.subr.mxu0 0.0
        %611 = vmatpush1.msra.mxu0 0.0
        %612 = vmatprep.subr.mxu0 0.0
        %613 = vmatpush1.msra.mxu0 0.0
        %614 = vmatprep.subr.mxu0 0.0
        %615 = vmatpush1.msra.mxu0 0.0
        %616 = vmatprep.subr.mxu0 0.0
        %617 = vmatpush1.msra.mxu0 0.0
        %618 = vmatprep.subr.mxu0 0.0
        %619 = vmatpush1.msra.mxu0 0.0
        %620 = vmatprep.subr.mxu0 0.0
        %621 = vmatpush1.msra.mxu0 0.0
        %622 = vmatprep.subr.mxu0 0.0
        %623 = vmatpush1.msra.mxu0 0.0
        %624 = vmatprep.subr.mxu0 0.0
        %625 = vmatpush1.msra.mxu0 0.0
        %626 = vmatprep.subr.mxu0 0.0
        %627 = vmatpush1.msra.mxu0 0.0
        %628 = vmatprep.subr.mxu0 0.0
        %629 = vmatpush1.msra.mxu0 0.0
        %630 = vmatprep.subr.mxu0 0.0
        %631 = vmatpush1.msra.mxu0 0.0
        %632 = vmatprep.subr.mxu0 0.0
        %633 = vmatpush1.msra.mxu0 0.0
        %634 = vmatprep.subr.mxu0 0.0
        %635 = vmatpush1.msra.mxu0 0.0
        %636 = vmatprep.mubr.f32.mxu0 0.0
        %637 = vmatmul.mubr.f32.gmra.mrb[0].mxu0 %v565
        %v638 = vpop.f32.mrb[0].mxu0
        %v639 = vadd.f32 0.0, %v638
        %v640 = vpop.f32.mrb[0].mxu0
        %641 = vmatprep.mubr.f32.mxu0 0.0
        %642 = vmatmul.mubr.f32.gmra.mrb[0].mxu0 %v568
        %v643 = vpop.f32.mrb[0].mxu0
        %v644 = vadd.f32 0.0, %v643
        %v645 = vpop.f32.mrb[0].mxu0
        %646 = vdwg.mxu0
        %648 = vset.pattern.permute.xlu0 0
        %649 = vperm.xlu0 %648, %v639
        %v650 = vpop.permute.xlu0 %649
        %653 = vset.pattern.permute.xlu0 0
        %654 = vperm.xlu0 %653, %v644
        %v655 = vpop.permute.xlu0 %654
        %v658 = vsel %vm563, %v558, 0
        %v661 = vsel %vm563, %v559, 0
        %v664 = vsel %vm451, %v555, 0
        %666 = vmatprep.subr.mxu0 0.0
        %667 = vmatpush1.msra.mxu0 %v664
        %668 = vmatprep.subr.mxu0 0.0
        %669 = vmatpush1.msra.mxu0 0.0
        %670 = vmatprep.subr.mxu0 0.0
        %671 = vmatpush1.msra.mxu0 0.0
        %672 = vmatprep.subr.mxu0 0.0
        %673 = vmatpush1.msra.mxu0 0.0
        %674 = vmatprep.subr.mxu0 0.0
        %675 = vmatpush1.msra.mxu0 0.0
        %676 = vmatprep.subr.mxu0 0.0
        %677 = vmatpush1.msra.mxu0 0.0
        %678 = vmatprep.subr.mxu0 0.0
        %679 = vmatpush1.msra.mxu0 0.0
        %680 = vmatprep.subr.mxu0 0.0
        %681 = vmatpush1.msra.mxu0 0.0
        %682 = vmatprep.subr.mxu0 0.0
        %683 = vmatpush1.msra.mxu0 0.0
        %684 = vmatprep.subr.mxu0 0.0
        %685 = vmatpush1.msra.mxu0 0.0
        %686 = vmatprep.subr.mxu0 0.0
        %687 = vmatpush1.msra.mxu0 0.0
        %688 = vmatprep.subr.mxu0 0.0
        %689 = vmatpush1.msra.mxu0 0.0
        %690 = vmatprep.subr.mxu0 0.0
        %691 = vmatpush1.msra.mxu0 0.0
        %692 = vmatprep.subr.mxu0 0.0
        %693 = vmatpush1.msra.mxu0 0.0
        %694 = vmatprep.subr.mxu0 0.0
        %695 = vmatpush1.msra.mxu0 0.0
        %696 = vmatprep.subr.mxu0 0.0
        %697 = vmatpush1.msra.mxu0 0.0
        %698 = vmatprep.subr.mxu0 0.0
        %699 = vmatpush1.msra.mxu0 0.0
        %700 = vmatprep.subr.mxu0 0.0
        %701 = vmatpush1.msra.mxu0 0.0
        %702 = vmatprep.subr.mxu0 0.0
        %703 = vmatpush1.msra.mxu0 0.0
        %704 = vmatprep.subr.mxu0 0.0
        %705 = vmatpush1.msra.mxu0 0.0
        %706 = vmatprep.subr.mxu0 0.0
        %707 = vmatpush1.msra.mxu0 0.0
        %708 = vmatprep.subr.mxu0 0.0
        %709 = vmatpush1.msra.mxu0 0.0
        %710 = vmatprep.subr.mxu0 0.0
        %711 = vmatpush1.msra.mxu0 0.0
        %712 = vmatprep.subr.mxu0 0.0
        %713 = vmatpush1.msra.mxu0 0.0
        %714 = vmatprep.subr.mxu0 0.0
        %715 = vmatpush1.msra.mxu0 0.0
        %716 = vmatprep.subr.mxu0 0.0
        %717 = vmatpush1.msra.mxu0 0.0
        %718 = vmatprep.subr.mxu0 0.0
        %719 = vmatpush1.msra.mxu0 0.0
        %720 = vmatprep.subr.mxu0 0.0
        %721 = vmatpush1.msra.mxu0 0.0
        %722 = vmatprep.subr.mxu0 0.0
        %723 = vmatpush1.msra.mxu0 0.0
        %724 = vmatprep.subr.mxu0 0.0
        %725 = vmatpush1.msra.mxu0 0.0
        %726 = vmatprep.subr.mxu0 0.0
        %727 = vmatpush1.msra.mxu0 0.0
        %728 = vmatprep.subr.mxu0 0.0
        %729 = vmatpush1.msra.mxu0 0.0
        %730 = vmatprep.mubr.f32.mxu0 0.0
        %731 = vmatmul.mubr.f32.gmra.mrb[0].mxu0 %v658
        %v732 = vpop.f32.mrb[0].mxu0
        %v733 = vadd.f32 %v650, %v732
        %v734 = vpop.f32.mrb[0].mxu0
        %735 = vmatprep.mubr.f32.mxu0 0.0
        %736 = vmatmul.mubr.f32.gmra.mrb[0].mxu0 %v661
        %v737 = vpop.f32.mrb[0].mxu0
        %v738 = vadd.f32 %v655, %v737
        %v739 = vpop.f32.mrb[0].mxu0
        %740 = vdwg.mxu0
        %v741 = vmax.f32 %v733, 0.0
        %v742 = vmax.f32 %v738, 0.0
        %v743 = vld [vmem:[%s4] sm:$0xff]
        %v744 = vld [vmem:[%s4 + $0x8] sm:$0xff]
        %v745 = vmul.f32 %v741, %v743
        %v746 = vmul.f32 %v742, %v744
        %vm747 = vcmask 220160
        %v748 = vsel %vm747, %v745, 0.0
        %749 = vadd.xlane.f32.xlu0 %v748
        %v750 = vpop.xlane.xlu0 %749
        %v751 = vsel %vm747, %v746, 0.0
        %752 = vadd.xlane.f32.xlu0 %v751
        %v753 = vpop.xlane.xlu0 %752
        %v754 = vmax.f32 %v750, 0.0
        %v755 = vmax.f32 %v753, 0.0
        %v756 = vld [vmem:[%s5] sm:$0xff]
        %v757 = vld [vmem:[%s5 + $0x8] sm:$0xff]
        %v760 = vlaneseq
        %v761 = vand.u32 %v760, 127
        %v762 = vlaneseq
        %v763 = vshrl.u32 %v762, 7
        %v764 = vsub.s32 %v761, %v763
        %v765 = vrot.slane %v754, %v764
        %v766 = vadd.s32 %v761, 4294967288
        %v767 = vlaneseq
        %v768 = vshrl.u32 %v767, 7
        %v769 = vsub.s32 %v766, %v768
        %v770 = vrot.slane %v755, %v769
        %vm771 = vcmask 130112
        %v772 = vsel %vm771, %v770, %v765
        %vm773 = vcmask 130048
        %v774 = vsel %vm773, %v772, 0
        %776 = vmatprep.subr.mxu0 0.0
        %777 = vmatpush1.msra.mxu0 %v756
        %778 = vmatprep.subr.mxu0 0.0
        %779 = vmatpush1.msra.mxu0 %v757
        %780 = vmatprep.subr.mxu0 0.0
        %781 = vmatpush1.msra.mxu0 0.0
        %782 = vmatprep.subr.mxu0 0.0
        %783 = vmatpush1.msra.mxu0 0.0
        %784 = vmatprep.subr.mxu0 0.0
        %785 = vmatpush1.msra.mxu0 0.0
        %786 = vmatprep.subr.mxu0 0.0
        %787 = vmatpush1.msra.mxu0 0.0
        %788 = vmatprep.subr.mxu0 0.0
        %789 = vmatpush1.msra.mxu0 0.0
        %790 = vmatprep.subr.mxu0 0.0
        %791 = vmatpush1.msra.mxu0 0.0
        %792 = vmatprep.subr.mxu0 0.0
        %793 = vmatpush1.msra.mxu0 0.0
        %794 = vmatprep.subr.mxu0 0.0
        %795 = vmatpush1.msra.mxu0 0.0
        %796 = vmatprep.subr.mxu0 0.0
        %797 = vmatpush1.msra.mxu0 0.0
        %798 = vmatprep.subr.mxu0 0.0
        %799 = vmatpush1.msra.mxu0 0.0
        %800 = vmatprep.subr.mxu0 0.0
        %801 = vmatpush1.msra.mxu0 0.0
        %802 = vmatprep.subr.mxu0 0.0
        %803 = vmatpush1.msra.mxu0 0.0
        %804 = vmatprep.subr.mxu0 0.0
        %805 = vmatpush1.msra.mxu0 0.0
        %806 = vmatprep.subr.mxu0 0.0
        %807 = vmatpush1.msra.mxu0 0.0
        %808 = vmatprep.subr.mxu0 0.0
        %809 = vmatpush1.msra.mxu0 0.0
        %810 = vmatprep.subr.mxu0 0.0
        %811 = vmatpush1.msra.mxu0 0.0
        %812 = vmatprep.subr.mxu0 0.0
        %813 = vmatpush1.msra.mxu0 0.0
        %814 = vmatprep.subr.mxu0 0.0
        %815 = vmatpush1.msra.mxu0 0.0
        %816 = vmatprep.subr.mxu0 0.0
        %817 = vmatpush1.msra.mxu0 0.0
        %818 = vmatprep.subr.mxu0 0.0
        %819 = vmatpush1.msra.mxu0 0.0
        %820 = vmatprep.subr.mxu0 0.0
        %821 = vmatpush1.msra.mxu0 0.0
        %822 = vmatprep.subr.mxu0 0.0
        %823 = vmatpush1.msra.mxu0 0.0
        %824 = vmatprep.subr.mxu0 0.0
        %825 = vmatpush1.msra.mxu0 0.0
        %826 = vmatprep.subr.mxu0 0.0
        %827 = vmatpush1.msra.mxu0 0.0
        %828 = vmatprep.subr.mxu0 0.0
        %829 = vmatpush1.msra.mxu0 0.0
        %830 = vmatprep.subr.mxu0 0.0
        %831 = vmatpush1.msra.mxu0 0.0
        %832 = vmatprep.subr.mxu0 0.0
        %833 = vmatpush1.msra.mxu0 0.0
        %834 = vmatprep.subr.mxu0 0.0
        %835 = vmatpush1.msra.mxu0 0.0
        %836 = vmatprep.subr.mxu0 0.0
        %837 = vmatpush1.msra.mxu0 0.0
        %838 = vmatprep.subr.mxu0 0.0
        %839 = vmatpush1.msra.mxu0 0.0
        %840 = vmatprep.mubr.f32.mxu0 0.0
        %841 = vmatmul.mubr.f32.gmra.mrb[0].mxu0 %v774
        %v842 = vpop.f32.mrb[0].mxu0
        %v843 = vadd.f32 0.0, %v842
        %v844 = vpop.f32.mrb[0].mxu0
        %845 = vdwg.mxu0
        %v846 = vsub.f32 0.0, %v843
        %v847 = vmul.f32 %v846, 1.442695
        %v848 = vpow.pop %v847
        %v849 = vadd.f32 %v848, 1.0
        %v850 = vrcp.pop %v849
        %v851 = vmul.f32 1.0, %v850
        %vm852 = vcmask 90112
        %853 = vst.msk [vmem:[%s244] sm:$0x1] %vm852, %v851
        %s854 = sand.u32 %s159, 1
        %s855 = scalar_lea.sflag [#allocation3], %s854
        %s856 = sand.u32 %s159, 1
        %s857 = scalar_lea.vmem [#allocation2], %s856
        // Predicated region
        $region45: #{_route_func3d_pallas.1} parent=43 // pred_check
          %p858 = pneg %p169
        $region46: #{_route_func3d_pallas.1} parent=43 // pred_check_branch
          %860 = sbr.rel (%p858) target = $region48
        $region47: #{_route_func3d_pallas.1} parent=43 // pred_region
          %s862 = ssub.s32 16, 16
          %863 = vsyncadd %s855, %s862
          %s864 = smul.addr %s20, 16
          %s865 = scalar_lea.hbm %s6, %s864
          %s867 = sshll.u32 %s857, 4
          %s868 = int_to_ptr.vmem [resolvable:$true] %s867
          %870 = dma.vmem_to_hbm [thread:$0]  %s868, 16, %s865, %s855
        $region48: #{_route_func3d_pallas.1} parent=43 // pred_fallthru
          _
      $region44: #{_route_func3d_pallas.1} parent=5 // pred_fallthru
        _
      %p871 = scmp.le.s32.totalorder 2, %s15
      // Predicated region
      $region49: #{_route_func3d_pallas.1} parent=5 // pred_check
        %p872 = pneg %p871
      $region50: #{_route_func3d_pallas.1} parent=5 // pred_check_branch
        %874 = sbr.rel (%p872) target = $region52
      $region51: #{_route_func3d_pallas.1} parent=5 // pred_region
        %s875 = ssub.s32 %s15, 2
        // Predicated region
        $region53: #{_route_func3d_pallas.1} parent=51 // pred_check
          %p876 = pneg %p175
        $region54: #{_route_func3d_pallas.1} parent=51 // pred_check_branch
          %878 = sbr.rel (%p876) target = $region56
        $region55: #{_route_func3d_pallas.1} parent=51 // pred_region
          %s879 = sand.u32 %s160, 1
          %s880 = scalar_lea.sflag [#allocation3], %s879
          %s881 = sand.u32 %s160, 1
          %s882 = scalar_lea.vmem [#allocation2], %s881
          %883 = dma.done %s880, 16
        $region56: #{_route_func3d_pallas.1} parent=51 // pred_fallthru
          _
      $region52: #{_route_func3d_pallas.1} parent=5 // pred_fallthru
        _
    $region6: #{_route_func3d_pallas.1} parent=1 // loop_footer
      %s19 = sadd.s32 1, %s15
    $region7: #{_route_func3d_pallas.1} parent=1 // loop_footer_branch
      %14 = sbr.rel target = $region3
    $region8: #{_route_func3d_pallas.1} parent=1 // loop_exit
      _
    %884 = vsyncpa [#allocation3], 1
    %s885 = scalar_lea.sflag [#allocation3], 1
    %886 = vsyncpa %s885, 1

</llo_original>
